<compile_context>
chip_gen: v5e
topology: v5e:2x2
jax: 0.10.0
libtpu: 0.0.40
codegen_flags: <defaults>
</compile_context>

<pallas_src>
import functools

import jax
import jax.numpy as jnp
from jax import lax
from jax.experimental import pallas as pl
from jax.experimental.pallas import tpu as pltpu


def _dice_kernel(out_ref, label_ref, part_ref,
                 inter_acc, osum_acc, lsum_acc,
                 *, acc_w, chunks_per_tile, last_full, last_tail):
    """One grid step == one spatial tile, all classes processed at once.

    out_ref   : VMEM [B, C, TP]      predictions tile (f32 or bf16)
    label_ref : VMEM [B, TP]         int32 labels tile
    part_ref  : VMEM [1, 3, C, 128]  per-split partial sums (inter/osum/lsum)
    *_acc     : VMEM [C, ACC_W] f32  fixed-width per-class accumulators
    """
    s = pl.program_id(0)              # split index ("parallel" / megacore axis)
    t = pl.program_id(1)              # spatial-tile index within the split
    n_s = pl.num_programs(0)
    n_t = pl.num_programs(1)

    C = out_ref.shape[1]
    # Tiny loop-invariant class-id iota; the broadcast happens inside the
    # compare, so no full-size (B, C, W) iota is materialized per step.
    cls = lax.broadcasted_iota(jnp.int32, (1, C, 1), 1)

    @pl.when(t == 0)
    def _init():
        inter_acc[...] = jnp.zeros_like(inter_acc)
        osum_acc[...] = jnp.zeros_like(osum_acc)
        lsum_acc[...] = jnp.zeros_like(lsum_acc)

    def accum_chunk(j, tail=0):
        lo = j * acc_w                                            # static, 128-aligned
        o = out_ref[:, :, lo:lo + acc_w].astype(jnp.float32)     # (B, C, W)
        lab = label_ref[:, lo:lo + acc_w]                         # (B, W)
        onehot = cls == lab[:, None, :]                           # (B, C, W) bool
        if tail:
            # Ragged tail of the flattened spatial axis: mask invalid lanes so
            # garbage from the clamped last-block DMA never reaches the sums
            # (masking `o` itself also keeps NaN garbage out of o*o).
            pos = lax.broadcasted_iota(jnp.int32, (1, 1, acc_w), 2)
            valid = pos < tail
            onehot = jnp.logical_and(onehot, valid)
            o = jnp.where(valid, o, 0.0)
        # No f32 one-hot materialization: selects instead of cast + multiply.
        inter_acc[...] += jnp.sum(jnp.where(onehot, o, 0.0), axis=0)
        osum_acc[...] += jnp.sum(o * o, axis=0)
        lsum_acc[...] += jnp.sum(jnp.where(onehot, 1.0, 0.0), axis=0)

    is_last_tile = jnp.logical_and(s == n_s - 1, t == n_t - 1)

    if last_full == chunks_per_tile and last_tail == 0:
        # The flattened spatial size divides evenly: single fast path.
        for j in range(chunks_per_tile):
            accum_chunk(j)
    else:
        @pl.when(jnp.logical_not(is_last_tile))
        def _full_tile():
            for j in range(chunks_per_tile):
                accum_chunk(j)

        @pl.when(is_last_tile)
        def _ragged_tile():
            for j in range(last_full):
                accum_chunk(j)
            if last_tail:
                accum_chunk(last_full, tail=last_tail)
            # chunks entirely past the valid length are skipped: zero work.

    @pl.when(t == n_t - 1)
    def _finalize():
        # Fold the (C, ACC_W) accumulators to a lane-dense (C, 128) slab and
        # emit this split's partials; the wrapper epilogue does the tiny final
        # reduction + dice formula.
        def fold(acc):
            r = acc[:, 0:128]
            for j in range(1, acc_w // 128):
                r = r + acc[:, j * 128:(j + 1) * 128]
            return r

        part_ref[0, 0] = fold(inter_acc[...])
        part_ref[0, 1] = fold(osum_acc[...])
        part_ref[0, 2] = fold(lsum_acc[...])


def dice_loss(outputs, label, smooth=1e-5, *, num_class=None,
              cast_inputs_to_bf16=False):
    """Pallas implementation of DiceLoss.forward.

    outputs: [B, C, H, W] or [B, C, X, Y, Z] float (f32 or bf16)
    label:   [B, H, W]    or [B, X, Y, Z]    integer class ids
    returns: scalar float32 loss
    """
    assert outputs.ndim in (4, 5) and label.ndim == outputs.ndim - 1
    B, C = outputs.shape[0], outputs.shape[1]
    if num_class is not None:
        assert num_class == C, "num_class must match outputs.shape[1]"

    if cast_inputs_to_bf16 and outputs.dtype == jnp.float32:
        # Optional: halves HBM traffic (the kernel is HBM-bound on v5e/v6e),
        # but slightly changes numerics vs the f32 reference -> off by default.
        outputs = outputs.astype(jnp.bfloat16)

    # Flatten ALL spatial dims -> lane-dense last dimension (free reshape for
    # channel-major contiguous data).  No jnp.pad of `outputs`: the ragged
    # last tile is masked inside the kernel instead.
    outputs = outputs.reshape(B, C, -1)
    label = label.reshape(B, -1).astype(jnp.int32)
    P = outputs.shape[-1]

    itemsize = jnp.dtype(outputs.dtype).itemsize
    c_pad = ((C + 7) // 8) * 8            # sublane padding of the class dim
    b_pad = ((B + 7) // 8) * 8

    # ---- spatial tile: target ~6 MiB per (double-buffered) input block -----
    TARGET_BLOCK_BYTES = 6 * 1024 * 1024
    per_pos = B * c_pad * itemsize + B * 4          # VMEM bytes per position
    tp_raw = max(128, (TARGET_BLOCK_BYTES // per_pos) // 128 * 128)
    p_ceil = ((P + 127) // 128) * 128
    tp_raw = min(tp_raw, p_ceil)

    # ---- fixed-width accumulators: scratch decoupled from tile size --------
    acc_w = min(1024, tp_raw)                       # multiple of 128
    tp = max(acc_w, (tp_raw // acc_w) * acc_w)      # tp is a multiple of acc_w
    num_tiles = -(-P // tp)
    rem = P - (num_tiles - 1) * tp                  # valid positions, last tile
    chunks_per_tile = tp // acc_w
    last_full = rem // acc_w
    last_tail = rem % acc_w

    # ---- split the tile axis across TensorCores (2x on v7x; harmless on the
    #      single-TC v5e/v6e where the splits run back-to-back) --------------
    n_split = 2 if (num_tiles >= 2 and num_tiles % 2 == 0) else 1
    # TODO(synk): odd num_tiles falls back to a single split; could pad the
    # grid with a fully-masked empty tile to always engage both v7x cores.
    tiles_per_split = num_tiles // n_split

    kernel = functools.partial(
        _dice_kernel, acc_w=acc_w, chunks_per_tile=chunks_per_tile,
        last_full=last_full, last_tail=last_tail)

    # ---- VMEM budget: double-buffered blocks + accumulators + margin -------
    block_bytes = B * c_pad * tp * itemsize
    lab_bytes = b_pad * tp * 4
    acc_bytes = 3 * c_pad * acc_w * 4
    need = 2 * (block_bytes + lab_bytes) + acc_bytes + (4 << 20)
    vmem_limit = int(min(48 << 20, max(32 << 20, need)))   # <=48 MiB: v7x-safe

    parts = pl.pallas_call(
        kernel,
        out_shape=jax.ShapeDtypeStruct((n_split, 3, C, 128), jnp.float32),
        grid_spec=pltpu.PrefetchScalarGridSpec(
            num_scalar_prefetch=0,
            grid=(n_split, tiles_per_split),
            in_specs=[
                # all classes, one spatial tile: block (B, C, tp)
                pl.BlockSpec((B, C, tp),
                             lambda s, t: (0, 0, s * tiles_per_split + t)),
                # matching label tile: block (B, tp)
                pl.BlockSpec((B, tp),
                             lambda s, t: (0, s * tiles_per_split + t)),
            ],
            # per-split partial sums, written once per split in the finalize
            out_specs=pl.BlockSpec((1, 3, C, 128), lambda s, t: (s, 0, 0, 0)),
            scratch_shapes=[
                pltpu.VMEM((C, acc_w), jnp.float32),   # inter
                pltpu.VMEM((C, acc_w), jnp.float32),   # outputs^2
                pltpu.VMEM((C, acc_w), jnp.float32),   # one-hot count
            ],
        ),
        compiler_params=pltpu.CompilerParams(
            dimension_semantics=("parallel", "arbitrary"),
            vmem_limit_bytes=vmem_limit,
        ),
    )(outputs, label)

    # Tiny epilogue: combine per-split partials and apply the dice formula.
    sums = jnp.sum(parts, axis=(0, 3))               # (3, C)
    inter, osum, lsum = sums[0], sums[1], sums[2]
    dice = (2.0 * inter + smooth) / (osum + lsum + smooth)
    return jnp.sum(1.0 - dice) / jnp.float32(C)


def dice_loss_ref(outputs, label, smooth=1e-5):
    """Pure-JAX reference mirroring the PyTorch module exactly."""
    C = outputs.shape[1]
    total = jnp.float32(0.0)
    for c in range(C):
        o = outputs[:, c].astype(jnp.float32)
        oh = (label == c).astype(jnp.float32)
        intersect = jnp.sum(o * oh)
        osum = jnp.sum(o * o)
        lsum = jnp.sum(oh * oh)
        total = total + (1.0 - (2.0 * intersect + smooth) / (osum + lsum + smooth))
    return total / C


if __name__ == "__main__":
    key = jax.random.PRNGKey(0)
    k1, k2 = jax.random.split(key)

    B, C, H, W = 2, 33, 16, 16  # num_class=33 as in the module's default
    # network predictions (e.g. softmax probabilities)
    logits = jax.random.normal(k1, (B, C, H, W), dtype=jnp.float32)
    outputs = jax.nn.softmax(logits, axis=1)
    # integer labels in [0, C)
    label = jax.random.randint(k2, (B, H, W), 0, C, dtype=jnp.int32)

    loss = jax.block_until_ready(dice_loss(outputs, label))
    ref = jax.block_until_ready(dice_loss_ref(outputs, label))

    assert jnp.allclose(loss, ref, rtol=1e-4, atol=1e-5), (loss, ref)
    print("KERNEL_OK")
</pallas_src>

<mosaic_0001>
module attributes {stable_mosaic.version = 11 : i64} {
  func.func @_dice_kernel(%arg0: i32, %arg1: i32, %arg2: memref<2x33x256xf32, #tpu.memory_space<vmem>>, %arg3: memref<2x256xi32, #tpu.memory_space<vmem>>, %arg4: memref<1x3x33x128xf32, #tpu.memory_space<vmem>>, %arg5: memref<33x256xf32, #tpu.memory_space<vmem>>, %arg6: memref<33x256xf32, #tpu.memory_space<vmem>>, %arg7: memref<33x256xf32, #tpu.memory_space<vmem>>) attributes {dimension_semantics = [#tpu.dimension_semantics<parallel>, #tpu.dimension_semantics<arbitrary>], iteration_bounds = array<i64: 1, 1>, scalar_prefetch = 0 : i64, scratch_operands = 3 : i64, tpu.core_type = #tpu.core_type<tc>, window_params = [{transform_indices = @transform_0, window_bounds = array<i64: 2, 33, 256>}, {transform_indices = @transform_1, window_bounds = array<i64: 2, 256>}, {transform_indices = @transform_2, window_bounds = array<i64: 1, 3, 33, 128>}]} {
    %0 = tpu.iota {dimensions = array<i32: 1>} : vector<1x33x1xi32>
    %c0_i32 = arith.constant 0 : i32
    %1 = arith.cmpi eq, %arg1, %c0_i32 : i32
    %2 = arith.extui %1 : i1 to i32
    %c0_i32_0 = arith.constant 0 : i32
    %3 = arith.cmpi ne, %2, %c0_i32_0 : i32
    scf.if %3 {
      %cst_24 = arith.constant 0.000000e+00 : f32
      %31 = vector.broadcast %cst_24 : f32 to vector<33x256xf32>
      %c0_25 = arith.constant 0 : index
      %c0_26 = arith.constant 0 : index
      %32 = vector.load %arg5[%c0_25, %c0_26] : memref<33x256xf32, #tpu.memory_space<vmem>>, vector<33x256xf32>
      tpu.vector_store %arg5[%c0_25, %c0_26], %31 {strides = array<i32>} : memref<33x256xf32, #tpu.memory_space<vmem>>, vector<33x256xf32>,
      %cst_27 = arith.constant 0.000000e+00 : f32
      %33 = vector.broadcast %cst_27 : f32 to vector<33x256xf32>
      %c0_28 = arith.constant 0 : index
      %c0_29 = arith.constant 0 : index
      %34 = vector.load %arg6[%c0_28, %c0_29] : memref<33x256xf32, #tpu.memory_space<vmem>>, vector<33x256xf32>
      tpu.vector_store %arg6[%c0_28, %c0_29], %33 {strides = array<i32>} : memref<33x256xf32, #tpu.memory_space<vmem>>, vector<33x256xf32>,
      %cst_30 = arith.constant 0.000000e+00 : f32
      %35 = vector.broadcast %cst_30 : f32 to vector<33x256xf32>
      %c0_31 = arith.constant 0 : index
      %c0_32 = arith.constant 0 : index
      %36 = vector.load %arg7[%c0_31, %c0_32] : memref<33x256xf32, #tpu.memory_space<vmem>>, vector<33x256xf32>
      tpu.vector_store %arg7[%c0_31, %c0_32], %35 {strides = array<i32>} : memref<33x256xf32, #tpu.memory_space<vmem>>, vector<33x256xf32>,
    } else {
    }
    %c0 = arith.constant 0 : index
    %c0_1 = arith.constant 0 : index
    %c0_2 = arith.constant 0 : index
    %4 = vector.load %arg2[%c0, %c0_1, %c0_2] : memref<2x33x256xf32, #tpu.memory_space<vmem>>, vector<2x33x256xf32>
    %c0_3 = arith.constant 0 : index
    %c0_4 = arith.constant 0 : index
    %5 = vector.load %arg3[%c0_3, %c0_4] : memref<2x256xi32, #tpu.memory_space<vmem>>, vector<2x256xi32>
    %6 = vector.shape_cast %5 : vector<2x256xi32> to vector<2x1x256xi32>
    %7 = vector.broadcast %0 : vector<1x33x1xi32> to vector<2x33x256xi32>
    %8 = vector.broadcast %6 : vector<2x1x256xi32> to vector<2x33x256xi32>
    %9 = arith.cmpi eq, %7, %8 : vector<2x33x256xi32>
    %c0_5 = arith.constant 0 : index
    %c0_6 = arith.constant 0 : index
    %10 = vector.load %arg5[%c0_5, %c0_6] : memref<33x256xf32, #tpu.memory_space<vmem>>, vector<33x256xf32>
    %cst = arith.constant 0.000000e+00 : f32
    %11 = vector.broadcast %cst : f32 to vector<2x33x256xf32>
    %12 = arith.select %9, %4, %11 : vector<2x33x256xi1>, vector<2x33x256xf32>
    %cst_7 = arith.constant dense<0.000000e+00> : vector<33x256xf32>
    %13 = vector.multi_reduction <add>, %12, %cst_7 [0] : vector<2x33x256xf32> to vector<33x256xf32>
    %14 = arith.addf %10, %13 : vector<33x256xf32>
    %c0_8 = arith.constant 0 : index
    %c0_9 = arith.constant 0 : index
    %15 = vector.load %arg5[%c0_8, %c0_9] : memref<33x256xf32, #tpu.memory_space<vmem>>, vector<33x256xf32>
    tpu.vector_store %arg5[%c0_8, %c0_9], %14 {strides = array<i32>} : memref<33x256xf32, #tpu.memory_space<vmem>>, vector<33x256xf32>,
    %c0_10 = arith.constant 0 : index
    %c0_11 = arith.constant 0 : index
    %16 = vector.load %arg6[%c0_10, %c0_11] : memref<33x256xf32, #tpu.memory_space<vmem>>, vector<33x256xf32>
    %17 = arith.mulf %4, %4 : vector<2x33x256xf32>
    %cst_12 = arith.constant dense<0.000000e+00> : vector<33x256xf32>
    %18 = vector.multi_reduction <add>, %17, %cst_12 [0] : vector<2x33x256xf32> to vector<33x256xf32>
    %19 = arith.addf %16, %18 : vector<33x256xf32>
    %c0_13 = arith.constant 0 : index
    %c0_14 = arith.constant 0 : index
    %20 = vector.load %arg6[%c0_13, %c0_14] : memref<33x256xf32, #tpu.memory_space<vmem>>, vector<33x256xf32>
    tpu.vector_store %arg6[%c0_13, %c0_14], %19 {strides = array<i32>} : memref<33x256xf32, #tpu.memory_space<vmem>>, vector<33x256xf32>,
    %c0_15 = arith.constant 0 : index
    %c0_16 = arith.constant 0 : index
    %21 = vector.load %arg7[%c0_15, %c0_16] : memref<33x256xf32, #tpu.memory_space<vmem>>, vector<33x256xf32>
    %cst_17 = arith.constant 1.000000e+00 : f32
    %cst_18 = arith.constant 0.000000e+00 : f32
    %22 = vector.broadcast %cst_17 : f32 to vector<2x33x256xf32>
    %23 = vector.broadcast %cst_18 : f32 to vector<2x33x256xf32>
    %24 = arith.select %9, %22, %23 : vector<2x33x256xi1>, vector<2x33x256xf32>
    %cst_19 = arith.constant dense<0.000000e+00> : vector<33x256xf32>
    %25 = vector.multi_reduction <add>, %24, %cst_19 [0] : vector<2x33x256xf32> to vector<33x256xf32>
    %26 = arith.addf %21, %25 : vector<33x256xf32>
    %c0_20 = arith.constant 0 : index
    %c0_21 = arith.constant 0 : index
    %27 = vector.load %arg7[%c0_20, %c0_21] : memref<33x256xf32, #tpu.memory_space<vmem>>, vector<33x256xf32>
    tpu.vector_store %arg7[%c0_20, %c0_21], %26 {strides = array<i32>} : memref<33x256xf32, #tpu.memory_space<vmem>>, vector<33x256xf32>,
    %c0_i32_22 = arith.constant 0 : i32
    %28 = arith.cmpi eq, %arg1, %c0_i32_22 : i32
    %29 = arith.extui %28 : i1 to i32
    %c0_i32_23 = arith.constant 0 : i32
    %30 = arith.cmpi ne, %29, %c0_i32_23 : i32
    scf.if %30 {
      %c0_24 = arith.constant 0 : index
      %c0_25 = arith.constant 0 : index
      %31 = vector.load %arg5[%c0_24, %c0_25] : memref<33x256xf32, #tpu.memory_space<vmem>>, vector<33x256xf32>
      %32 = vector.extract_strided_slice %31 {offsets = [0, 0], sizes = [33, 128], strides = [1, 1]} : vector<33x256xf32> to vector<33x128xf32>
      %33 = vector.extract_strided_slice %31 {offsets = [0, 128], sizes = [33, 128], strides = [1, 1]} : vector<33x256xf32> to vector<33x128xf32>
      %34 = arith.addf %32, %33 : vector<33x128xf32>
      %c0_26 = arith.constant 0 : index
      %c0_27 = arith.constant 0 : index
      %c0_28 = arith.constant 0 : index
      %c0_29 = arith.constant 0 : index
      %35 = vector.load %arg4[%c0_26, %c0_27, %c0_28, %c0_29] : memref<1x3x33x128xf32, #tpu.memory_space<vmem>>, vector<1x1x33x128xf32>
      %36 = vector.shape_cast %35 : vector<1x1x33x128xf32> to vector<33x128xf32>
      %37 = vector.shape_cast %34 : vector<33x128xf32> to vector<1x1x33x128xf32>
      tpu.vector_store %arg4[%c0_26, %c0_27, %c0_28, %c0_29], %37 {strides = array<i32>} : memref<1x3x33x128xf32, #tpu.memory_space<vmem>>, vector<1x1x33x128xf32>,
      %c0_30 = arith.constant 0 : index
      %c0_31 = arith.constant 0 : index
      %38 = vector.load %arg6[%c0_30, %c0_31] : memref<33x256xf32, #tpu.memory_space<vmem>>, vector<33x256xf32>
      %39 = vector.extract_strided_slice %38 {offsets = [0, 0], sizes = [33, 128], strides = [1, 1]} : vector<33x256xf32> to vector<33x128xf32>
      %40 = vector.extract_strided_slice %38 {offsets = [0, 128], sizes = [33, 128], strides = [1, 1]} : vector<33x256xf32> to vector<33x128xf32>
      %41 = arith.addf %39, %40 : vector<33x128xf32>
      %c0_32 = arith.constant 0 : index
      %c1 = arith.constant 1 : index
      %c0_33 = arith.constant 0 : index
      %c0_34 = arith.constant 0 : index
      %42 = vector.load %arg4[%c0_32, %c1, %c0_33, %c0_34] : memref<1x3x33x128xf32, #tpu.memory_space<vmem>>, vector<1x1x33x128xf32>
      %43 = vector.shape_cast %42 : vector<1x1x33x128xf32> to vector<33x128xf32>
      %44 = vector.shape_cast %41 : vector<33x128xf32> to vector<1x1x33x128xf32>
      tpu.vector_store %arg4[%c0_32, %c1, %c0_33, %c0_34], %44 {strides = array<i32>} : memref<1x3x33x128xf32, #tpu.memory_space<vmem>>, vector<1x1x33x128xf32>,
      %c0_35 = arith.constant 0 : index
      %c0_36 = arith.constant 0 : index
      %45 = vector.load %arg7[%c0_35, %c0_36] : memref<33x256xf32, #tpu.memory_space<vmem>>, vector<33x256xf32>
      %46 = vector.extract_strided_slice %45 {offsets = [0, 0], sizes = [33, 128], strides = [1, 1]} : vector<33x256xf32> to vector<33x128xf32>
      %47 = vector.extract_strided_slice %45 {offsets = [0, 128], sizes = [33, 128], strides = [1, 1]} : vector<33x256xf32> to vector<33x128xf32>
      %48 = arith.addf %46, %47 : vector<33x128xf32>
      %c0_37 = arith.constant 0 : index
      %c2 = arith.constant 2 : index
      %c0_38 = arith.constant 0 : index
      %c0_39 = arith.constant 0 : index
      %49 = vector.load %arg4[%c0_37, %c2, %c0_38, %c0_39] : memref<1x3x33x128xf32, #tpu.memory_space<vmem>>, vector<1x1x33x128xf32>
      %50 = vector.shape_cast %49 : vector<1x1x33x128xf32> to vector<33x128xf32>
      %51 = vector.shape_cast %48 : vector<33x128xf32> to vector<1x1x33x128xf32>
      tpu.vector_store %arg4[%c0_37, %c2, %c0_38, %c0_39], %51 {strides = array<i32>} : memref<1x3x33x128xf32, #tpu.memory_space<vmem>>, vector<1x1x33x128xf32>,
    } else {
    }
    return
  }
  func.func @transform_0(%arg0: i32, %arg1: i32) -> (i32, i32, i32) {
    %c1_i32 = arith.constant 1 : i32
    %0 = arith.muli %arg0, %c1_i32 : i32
    %1 = arith.addi %0, %arg1 : i32
    %c0_i32 = arith.constant 0 : i32
    %c0_i32_0 = arith.constant 0 : i32
    %c0_i32_1 = arith.constant 0 : i32
    return %c0_i32, %c0_i32_0, %1 : i32, i32, i32
  }
  func.func @transform_1(%arg0: i32, %arg1: i32) -> (i32, i32) {
    %c1_i32 = arith.constant 1 : i32
    %0 = arith.muli %arg0, %c1_i32 : i32
    %1 = arith.addi %0, %arg1 : i32
    %c0_i32 = arith.constant 0 : i32
    %c0_i32_0 = arith.constant 0 : i32
    return %c0_i32, %1 : i32, i32
  }
  func.func @transform_2(%arg0: i32, %arg1: i32) -> (i32, i32, i32, i32) {
    %c0_i32 = arith.constant 0 : i32
    %c0_i32_0 = arith.constant 0 : i32
    %c0_i32_1 = arith.constant 0 : i32
    %c0_i32_2 = arith.constant 0 : i32
    return %arg0, %c0_i32, %c0_i32_0, %c0_i32_1 : i32, i32, i32, i32
  }
}

</mosaic_0001>

<llo_original>
// kernel: tpu_custom_call.1
$region0: #{tpu_custom_call.1}
  #allocation0 [shape = 'u32[]', space=smem, size = 0x4, offset = 0x4, fixed_abs, tag = 'smem constant byte address 0x4 - core index']
  #allocation1 [shape = 'u32[72,128]{1,0:T(1,128)}', space=vmem, size = 0x9000, scoped, tag = 'internal scratch']
  #allocation2 [shape = 'f32[33,256]{1,0:T(8,128)}', space=vmem, size = 0xa000, scoped, tag = 'scratch operand']
  #allocation3 [shape = 'f32[33,256]{1,0:T(8,128)}', space=vmem, size = 0xa000, scoped, tag = 'scratch operand']
  #allocation4 [shape = 'f32[33,256]{1,0:T(8,128)}', space=vmem, size = 0xa000, scoped, tag = 'scratch operand']
  %s0 = inlined_call_operand.vmem [shape: f32[2,33,256], index: 0, kind: input, shape index: {}]
  %s1 = inlined_call_operand.vmem [shape: s32[2,256], index: 1, kind: input, shape index: {}]
  %s2 = inlined_call_operand.vmem [shape: f32[1,3,33,128], index: 2, kind: output, shape index: {}]
  %s3 = sld [smem:[#allocation0]]
  $region26: #{tpu_custom_call.1} parent=0
    _
  %s5 = ssub.s32 1, %s3
  %s6 = scalar_select 0, %s5, %s3
  // Predicated region
  $region2: #{tpu_custom_call.1} parent=0 // pred_check
    _
  $region3: #{tpu_custom_call.1} parent=0 // pred_check_branch
    %8 = sbr.rel (0) target = $region5
  $region4: #{tpu_custom_call.1} parent=0 // pred_region
    %s9 = sadd.s32 0, 0
    %s10 = smul.u32 2, %s9
    %p11 = scmp.lt.s32.totalorder %s10, 1
    %s12 = scalar_select %p11, %s10, 1
    %s13 = smul.addr %s12, 8
    %s14 = scalar_lea.vmem %s0, %s13
    %s15 = sadd.s32 0, 0
    %s16 = smul.u32 2, %s15
  $region5: #{tpu_custom_call.1} parent=0 // pred_fallthru
    _
  // Predicated region
  $region6: #{tpu_custom_call.1} parent=0 // pred_check
    _
  $region7: #{tpu_custom_call.1} parent=0 // pred_check_branch
    %18 = sbr.rel (0) target = $region9
  $region8: #{tpu_custom_call.1} parent=0 // pred_region
    %s19 = sadd.s32 0, 0
    %s20 = smul.u32 2, %s19
    %p21 = scmp.lt.s32.totalorder %s20, 1
    %s22 = scalar_select %p21, %s20, 1
    %s23 = smul.addr %s22, 2
    %s24 = scalar_lea.vmem %s1, %s23
    %s25 = sadd.s32 0, 0
    %s26 = smul.u32 2, %s25
  $region9: #{tpu_custom_call.1} parent=0 // pred_fallthru
    _
  %s27 = sadd.s32 0, 0
  %s28 = smul.u32 2, %s27
  %p29 = scmp.lt.s32.totalorder %s28, 1
  %s30 = scalar_select %p29, %s28, 1
  %s31 = smul.addr %s30, 8
  %s32 = scalar_lea.vmem %s0, %s31
  %s33 = sadd.s32 0, 0
  %s34 = smul.u32 2, %s33
  %p35 = scmp.lt.s32.totalorder %s34, 1
  %s36 = scalar_select %p35, %s34, 1
  %s37 = smul.addr %s36, 2
  %s38 = scalar_lea.vmem %s1, %s37
  %s39 = sadd.s32 0, 0
  %s40 = smul.u32 2, %s39
  %p41 = scmp.lt.s32.totalorder %s40, 1
  %s42 = scalar_select %p41, %s40, 1
  %s43 = smul.addr %s42, 8
  %s44 = scalar_lea.vmem %s0, %s43
  %s45 = sadd.s32 0, 0
  %s46 = smul.u32 2, %s45
  %s47 = sadd.s32 0, 0
  %s48 = smul.u32 2, %s47
  %p49 = scmp.lt.s32.totalorder %s48, 1
  %s50 = scalar_select %p49, %s48, 1
  %s51 = smul.addr %s50, 2
  %s52 = scalar_lea.vmem %s1, %s51
  %s53 = sadd.s32 0, 0
  %s54 = smul.u32 2, %s53
  %v55 = vlaneseq
  %v56 = vshrl.u32 %v55, 7
  %v57 = vadd.s32 %v56, 8
  %v58 = vadd.s32 %v56, 16
  %v59 = vadd.s32 %v56, 24
  %v60 = vadd.s32 %v56, 32
  %p61 = scmp.eq.s32.totalorder 0, 0
  // Predicated region
  $region10: #{tpu_custom_call.1} parent=0 // pred_check
    %p62 = pneg %p61
  $region11: #{tpu_custom_call.1} parent=0 // pred_check_branch
    %64 = sbr.rel (%p62) target = $region13
  $region12: #{tpu_custom_call.1} parent=0 // pred_region
    %65 = vst [vmem:[#allocation2] sm:$0xff] 0.0
    %66 = vst [vmem:[#allocation2 + $0x8] sm:$0xff] 0.0
    %67 = vst [vmem:[#allocation2 + $0x10] sm:$0xff] 0.0
    %68 = vst [vmem:[#allocation2 + $0x18] sm:$0xff] 0.0
    %69 = vst [vmem:[#allocation2 + $0x20] sm:$0xff] 0.0
    %70 = vst [vmem:[#allocation2 + $0x28] sm:$0xff] 0.0
    %71 = vst [vmem:[#allocation2 + $0x30] sm:$0xff] 0.0
    %72 = vst [vmem:[#allocation2 + $0x38] sm:$0xff] 0.0
    %73 = vst [vmem:[#allocation2 + $0x40] sm:$0x1] 0.0
    %74 = vst [vmem:[#allocation2 + $0x48] sm:$0x1] 0.0
    %75 = vst [vmem:[#allocation3] sm:$0xff] 0.0
    %76 = vst [vmem:[#allocation3 + $0x8] sm:$0xff] 0.0
    %77 = vst [vmem:[#allocation3 + $0x10] sm:$0xff] 0.0
    %78 = vst [vmem:[#allocation3 + $0x18] sm:$0xff] 0.0
    %79 = vst [vmem:[#allocation3 + $0x20] sm:$0xff] 0.0
    %80 = vst [vmem:[#allocation3 + $0x28] sm:$0xff] 0.0
    %81 = vst [vmem:[#allocation3 + $0x30] sm:$0xff] 0.0
    %82 = vst [vmem:[#allocation3 + $0x38] sm:$0xff] 0.0
    %83 = vst [vmem:[#allocation3 + $0x40] sm:$0x1] 0.0
    %84 = vst [vmem:[#allocation3 + $0x48] sm:$0x1] 0.0
    %85 = vst [vmem:[#allocation4] sm:$0xff] 0.0
    %86 = vst [vmem:[#allocation4 + $0x8] sm:$0xff] 0.0
    %87 = vst [vmem:[#allocation4 + $0x10] sm:$0xff] 0.0
    %88 = vst [vmem:[#allocation4 + $0x18] sm:$0xff] 0.0
    %89 = vst [vmem:[#allocation4 + $0x20] sm:$0xff] 0.0
    %90 = vst [vmem:[#allocation4 + $0x28] sm:$0xff] 0.0
    %91 = vst [vmem:[#allocation4 + $0x30] sm:$0xff] 0.0
    %92 = vst [vmem:[#allocation4 + $0x38] sm:$0xff] 0.0
    %93 = vst [vmem:[#allocation4 + $0x40] sm:$0x1] 0.0
    %94 = vst [vmem:[#allocation4 + $0x48] sm:$0x1] 0.0
  $region13: #{tpu_custom_call.1} parent=0 // pred_fallthru
    _
  %v95 = vld [vmem:[%s44] sm:$0xff]
  %v96 = vld [vmem:[%s44 + $0x8] sm:$0xff]
  %v97 = vld [vmem:[%s44 + $0x10] sm:$0xff]
  %v98 = vld [vmem:[%s44 + $0x18] sm:$0xff]
  %v99 = vld [vmem:[%s44 + $0x20] sm:$0xff]
  %v100 = vld [vmem:[%s44 + $0x28] sm:$0xff]
  %v101 = vld [vmem:[%s44 + $0x30] sm:$0xff]
  %v102 = vld [vmem:[%s44 + $0x38] sm:$0xff]
  %v103 = vld [vmem:[%s44 + $0x40] sm:$0x1]
  %v104 = vld [vmem:[%s44 + $0x48] sm:$0x1]
  %v105 = vld [vmem:[%s44 + $0x50] sm:$0xff]
  %v106 = vld [vmem:[%s44 + $0x58] sm:$0xff]
  %v107 = vld [vmem:[%s44 + $0x60] sm:$0xff]
  %v108 = vld [vmem:[%s44 + $0x68] sm:$0xff]
  %v109 = vld [vmem:[%s44 + $0x70] sm:$0xff]
  %v110 = vld [vmem:[%s44 + $0x78] sm:$0xff]
  %v111 = vld [vmem:[%s44 + $0x80] sm:$0xff]
  %v112 = vld [vmem:[%s44 + $0x88] sm:$0xff]
  %v113 = vld [vmem:[%s44 + $0x90] sm:$0x1]
  %v114 = vld [vmem:[%s44 + $0x98] sm:$0x1]
  %v115 = vld [vmem:[%s52] sm:$0xf]
  %v116 = vrot.slane %v115, 1
  %v117 = vrot.slane %v115, 2
  %v118 = vrot.slane %v115, 3
  %vm119 = vcmask 1040384
  %v120 = vsel %vm119, %v115, %v116
  %vm121 = vcmask 1042434
  %v122 = vsel %vm121, %v117, %v118
  %vm123 = vcmask 1041408
  %v124 = vsel %vm123, %v120, %v122
  %vm125 = vcmask 1041409
  %v126 = vsel %vm125, %v115, %v116
  %vm127 = vcmask 1043459
  %v128 = vsel %vm127, %v117, %v118
  %vm129 = vcmask 1042433
  %v130 = vsel %vm129, %v126, %v128
  %v131 = vrot.slane %v130, 1
  %v132 = vperm.slane %v124, 0
  %v133 = vperm.slane %v124, 1
  %v134 = vperm.slane %v131, 0
  %v135 = vperm.slane %v131, 1
  %vm136 = vcmp.eq.s32.totalorder %v56, %v132
  %vm137 = vcmp.eq.s32.totalorder %v56, %v133
  %vm138 = vcmp.eq.s32.totalorder %v57, %v132
  %vm139 = vcmp.eq.s32.totalorder %v57, %v133
  %vm140 = vcmp.eq.s32.totalorder %v58, %v132
  %vm141 = vcmp.eq.s32.totalorder %v58, %v133
  %vm142 = vcmp.eq.s32.totalorder %v59, %v132
  %vm143 = vcmp.eq.s32.totalorder %v59, %v133
  %vm144 = vcmp.eq.s32.totalorder %v60, %v132
  %vm145 = vcmp.eq.s32.totalorder %v60, %v133
  %vm146 = vcmp.eq.s32.totalorder %v56, %v134
  %vm147 = vcmp.eq.s32.totalorder %v56, %v135
  %vm148 = vcmp.eq.s32.totalorder %v57, %v134
  %vm149 = vcmp.eq.s32.totalorder %v57, %v135
  %vm150 = vcmp.eq.s32.totalorder %v58, %v134
  %vm151 = vcmp.eq.s32.totalorder %v58, %v135
  %vm152 = vcmp.eq.s32.totalorder %v59, %v134
  %vm153 = vcmp.eq.s32.totalorder %v59, %v135
  %vm154 = vcmp.eq.s32.totalorder %v60, %v134
  %vm155 = vcmp.eq.s32.totalorder %v60, %v135
  %v156 = vld [vmem:[#allocation2] sm:$0xff]
  %v157 = vld [vmem:[#allocation2 + $0x8] sm:$0xff]
  %v158 = vld [vmem:[#allocation2 + $0x10] sm:$0xff]
  %v159 = vld [vmem:[#allocation2 + $0x18] sm:$0xff]
  %v160 = vld [vmem:[#allocation2 + $0x20] sm:$0xff]
  %v161 = vld [vmem:[#allocation2 + $0x28] sm:$0xff]
  %v162 = vld [vmem:[#allocation2 + $0x30] sm:$0xff]
  %v163 = vld [vmem:[#allocation2 + $0x38] sm:$0xff]
  %v164 = vld [vmem:[#allocation2 + $0x40] sm:$0x1]
  %v165 = vld [vmem:[#allocation2 + $0x48] sm:$0x1]
  %v166 = vsel %vm136, %v95, 0.0
  %v167 = vsel %vm137, %v96, 0.0
  %v168 = vsel %vm138, %v97, 0.0
  %v169 = vsel %vm139, %v98, 0.0
  %v170 = vsel %vm140, %v99, 0.0
  %v171 = vsel %vm141, %v100, 0.0
  %v172 = vsel %vm142, %v101, 0.0
  %v173 = vsel %vm143, %v102, 0.0
  %v174 = vsel %vm144, %v103, 0.0
  %v175 = vsel %vm145, %v104, 0.0
  %v176 = vsel %vm146, %v105, 0.0
  %v177 = vsel %vm147, %v106, 0.0
  %v178 = vsel %vm148, %v107, 0.0
  %v179 = vsel %vm149, %v108, 0.0
  %v180 = vsel %vm150, %v109, 0.0
  %v181 = vsel %vm151, %v110, 0.0
  %v182 = vsel %vm152, %v111, 0.0
  %v183 = vsel %vm153, %v112, 0.0
  %v184 = vsel %vm154, %v113, 0.0
  %v185 = vsel %vm155, %v114, 0.0
  %v186 = vadd.f32 %v166, %v176
  %v187 = vadd.f32 %v167, %v177
  %v188 = vadd.f32 %v168, %v178
  %v189 = vadd.f32 %v169, %v179
  %v190 = vadd.f32 %v170, %v180
  %v191 = vadd.f32 %v171, %v181
  %v192 = vadd.f32 %v172, %v182
  %v193 = vadd.f32 %v173, %v183
  %v194 = vsel %vm119, %v174, 0.0
  %v195 = vsel %vm119, %v184, 0.0
  %v196 = vadd.f32 %v194, %v195
  %v197 = vsel %vm119, %v175, 0.0
  %v198 = vsel %vm119, %v185, 0.0
  %v199 = vadd.f32 %v197, %v198
  %v200 = vadd.f32 %v156, %v186
  %v201 = vadd.f32 %v157, %v187
  %v202 = vadd.f32 %v158, %v188
  %v203 = vadd.f32 %v159, %v189
  %v204 = vadd.f32 %v160, %v190
  %v205 = vadd.f32 %v161, %v191
  %v206 = vadd.f32 %v162, %v192
  %v207 = vadd.f32 %v163, %v193
  %v208 = vadd.f32 %v164, %v196
  %v209 = vadd.f32 %v165, %v199
  %210 = vst [vmem:[#allocation2] sm:$0xff] %v200
  %211 = vst [vmem:[#allocation2 + $0x8] sm:$0xff] %v201
  %212 = vst [vmem:[#allocation2 + $0x10] sm:$0xff] %v202
  %213 = vst [vmem:[#allocation2 + $0x18] sm:$0xff] %v203
  %214 = vst [vmem:[#allocation2 + $0x20] sm:$0xff] %v204
  %215 = vst [vmem:[#allocation2 + $0x28] sm:$0xff] %v205
  %216 = vst [vmem:[#allocation2 + $0x30] sm:$0xff] %v206
  %217 = vst [vmem:[#allocation2 + $0x38] sm:$0xff] %v207
  %218 = vst [vmem:[#allocation2 + $0x40] sm:$0x1] %v208
  %219 = vst [vmem:[#allocation2 + $0x48] sm:$0x1] %v209
  %v220 = vld [vmem:[#allocation3] sm:$0xff]
  %v221 = vld [vmem:[#allocation3 + $0x8] sm:$0xff]
  %v222 = vld [vmem:[#allocation3 + $0x10] sm:$0xff]
  %v223 = vld [vmem:[#allocation3 + $0x18] sm:$0xff]
  %v224 = vld [vmem:[#allocation3 + $0x20] sm:$0xff]
  %v225 = vld [vmem:[#allocation3 + $0x28] sm:$0xff]
  %v226 = vld [vmem:[#allocation3 + $0x30] sm:$0xff]
  %v227 = vld [vmem:[#allocation3 + $0x38] sm:$0xff]
  %v228 = vld [vmem:[#allocation3 + $0x40] sm:$0x1]
  %v229 = vld [vmem:[#allocation3 + $0x48] sm:$0x1]
  %v230 = vmul.f32 %v95, %v95
  %v231 = vmul.f32 %v96, %v96
  %v232 = vmul.f32 %v97, %v97
  %v233 = vmul.f32 %v98, %v98
  %v234 = vmul.f32 %v99, %v99
  %v235 = vmul.f32 %v100, %v100
  %v236 = vmul.f32 %v101, %v101
  %v237 = vmul.f32 %v102, %v102
  %v238 = vmul.f32 %v103, %v103
  %v239 = vmul.f32 %v104, %v104
  %v240 = vmul.f32 %v105, %v105
  %v241 = vmul.f32 %v106, %v106
  %v242 = vmul.f32 %v107, %v107
  %v243 = vmul.f32 %v108, %v108
  %v244 = vmul.f32 %v109, %v109
  %v245 = vmul.f32 %v110, %v110
  %v246 = vmul.f32 %v111, %v111
  %v247 = vmul.f32 %v112, %v112
  %v248 = vmul.f32 %v113, %v113
  %v249 = vmul.f32 %v114, %v114
  %v250 = vadd.f32 %v230, %v240
  %v251 = vadd.f32 %v231, %v241
  %v252 = vadd.f32 %v232, %v242
  %v253 = vadd.f32 %v233, %v243
  %v254 = vadd.f32 %v234, %v244
  %v255 = vadd.f32 %v235, %v245
  %v256 = vadd.f32 %v236, %v246
  %v257 = vadd.f32 %v237, %v247
  %v258 = vsel %vm119, %v238, 0.0
  %v259 = vsel %vm119, %v248, 0.0
  %v260 = vadd.f32 %v258, %v259
  %v261 = vsel %vm119, %v239, 0.0
  %v262 = vsel %vm119, %v249, 0.0
  %v263 = vadd.f32 %v261, %v262
  %v264 = vadd.f32 %v220, %v250
  %v265 = vadd.f32 %v221, %v251
  %v266 = vadd.f32 %v222, %v252
  %v267 = vadd.f32 %v223, %v253
  %v268 = vadd.f32 %v224, %v254
  %v269 = vadd.f32 %v225, %v255
  %v270 = vadd.f32 %v226, %v256
  %v271 = vadd.f32 %v227, %v257
  %v272 = vadd.f32 %v228, %v260
  %v273 = vadd.f32 %v229, %v263
  %274 = vst [vmem:[#allocation3] sm:$0xff] %v264
  %275 = vst [vmem:[#allocation3 + $0x8] sm:$0xff] %v265
  %276 = vst [vmem:[#allocation3 + $0x10] sm:$0xff] %v266
  %277 = vst [vmem:[#allocation3 + $0x18] sm:$0xff] %v267
  %278 = vst [vmem:[#allocation3 + $0x20] sm:$0xff] %v268
  %279 = vst [vmem:[#allocation3 + $0x28] sm:$0xff] %v269
  %280 = vst [vmem:[#allocation3 + $0x30] sm:$0xff] %v270
  %281 = vst [vmem:[#allocation3 + $0x38] sm:$0xff] %v271
  %282 = vst [vmem:[#allocation3 + $0x40] sm:$0x1] %v272
  %283 = vst [vmem:[#allocation3 + $0x48] sm:$0x1] %v273
  %v284 = vld [vmem:[#allocation4] sm:$0xff]
  %v285 = vld [vmem:[#allocation4 + $0x8] sm:$0xff]
  %v286 = vld [vmem:[#allocation4 + $0x10] sm:$0xff]
  %v287 = vld [vmem:[#allocation4 + $0x18] sm:$0xff]
  %v288 = vld [vmem:[#allocation4 + $0x20] sm:$0xff]
  %v289 = vld [vmem:[#allocation4 + $0x28] sm:$0xff]
  %v290 = vld [vmem:[#allocation4 + $0x30] sm:$0xff]
  %v291 = vld [vmem:[#allocation4 + $0x38] sm:$0xff]
  %v292 = vld [vmem:[#allocation4 + $0x40] sm:$0x1]
  %v293 = vld [vmem:[#allocation4 + $0x48] sm:$0x1]
  %v294 = vsel %vm136, 1.0, 0.0
  %v295 = vsel %vm137, 1.0, 0.0
  %v296 = vsel %vm138, 1.0, 0.0
  %v297 = vsel %vm139, 1.0, 0.0
  %v298 = vsel %vm140, 1.0, 0.0
  %v299 = vsel %vm141, 1.0, 0.0
  %v300 = vsel %vm142, 1.0, 0.0
  %v301 = vsel %vm143, 1.0, 0.0
  %v302 = vsel %vm144, 1.0, 0.0
  %v303 = vsel %vm145, 1.0, 0.0
  %v304 = vsel %vm146, 1.0, 0.0
  %v305 = vsel %vm147, 1.0, 0.0
  %v306 = vsel %vm148, 1.0, 0.0
  %v307 = vsel %vm149, 1.0, 0.0
  %v308 = vsel %vm150, 1.0, 0.0
  %v309 = vsel %vm151, 1.0, 0.0
  %v310 = vsel %vm152, 1.0, 0.0
  %v311 = vsel %vm153, 1.0, 0.0
  %v312 = vsel %vm154, 1.0, 0.0
  %v313 = vsel %vm155, 1.0, 0.0
  %v314 = vadd.f32 %v294, %v304
  %v315 = vadd.f32 %v295, %v305
  %v316 = vadd.f32 %v296, %v306
  %v317 = vadd.f32 %v297, %v307
  %v318 = vadd.f32 %v298, %v308
  %v319 = vadd.f32 %v299, %v309
  %v320 = vadd.f32 %v300, %v310
  %v321 = vadd.f32 %v301, %v311
  %v322 = vsel %vm119, %v302, 0.0
  %v323 = vsel %vm119, %v312, 0.0
  %v324 = vadd.f32 %v322, %v323
  %v325 = vsel %vm119, %v303, 0.0
  %v326 = vsel %vm119, %v313, 0.0
  %v327 = vadd.f32 %v325, %v326
  %v328 = vadd.f32 %v284, %v314
  %v329 = vadd.f32 %v285, %v315
  %v330 = vadd.f32 %v286, %v316
  %v331 = vadd.f32 %v287, %v317
  %v332 = vadd.f32 %v288, %v318
  %v333 = vadd.f32 %v289, %v319
  %v334 = vadd.f32 %v290, %v320
  %v335 = vadd.f32 %v291, %v321
  %v336 = vadd.f32 %v292, %v324
  %v337 = vadd.f32 %v293, %v327
  %338 = vst [vmem:[#allocation4] sm:$0xff] %v328
  %339 = vst [vmem:[#allocation4 + $0x8] sm:$0xff] %v329
  %340 = vst [vmem:[#allocation4 + $0x10] sm:$0xff] %v330
  %341 = vst [vmem:[#allocation4 + $0x18] sm:$0xff] %v331
  %342 = vst [vmem:[#allocation4 + $0x20] sm:$0xff] %v332
  %343 = vst [vmem:[#allocation4 + $0x28] sm:$0xff] %v333
  %344 = vst [vmem:[#allocation4 + $0x30] sm:$0xff] %v334
  %345 = vst [vmem:[#allocation4 + $0x38] sm:$0xff] %v335
  %346 = vst [vmem:[#allocation4 + $0x40] sm:$0x1] %v336
  %347 = vst [vmem:[#allocation4 + $0x48] sm:$0x1] %v337
  // Predicated region
  $region14: #{tpu_custom_call.1} parent=0 // pred_check
    %p348 = pneg %p61
  $region15: #{tpu_custom_call.1} parent=0 // pred_check_branch
    %350 = sbr.rel (%p348) target = $region17
  $region16: #{tpu_custom_call.1} parent=0 // pred_region
    %v351 = vld [vmem:[#allocation2] sm:$0xff]
    %v352 = vld [vmem:[#allocation2 + $0x8] sm:$0xff]
    %v353 = vld [vmem:[#allocation2 + $0x10] sm:$0xff]
    %v354 = vld [vmem:[#allocation2 + $0x18] sm:$0xff]
    %v355 = vld [vmem:[#allocation2 + $0x20] sm:$0xff]
    %v356 = vld [vmem:[#allocation2 + $0x28] sm:$0xff]
    %v357 = vld [vmem:[#allocation2 + $0x30] sm:$0xff]
    %v358 = vld [vmem:[#allocation2 + $0x38] sm:$0xff]
    %v359 = vld [vmem:[#allocation2 + $0x40] sm:$0x1]
    %v360 = vld [vmem:[#allocation2 + $0x48] sm:$0x1]
    %v361 = vadd.f32 %v351, %v352
    %v362 = vadd.f32 %v353, %v354
    %v363 = vadd.f32 %v355, %v356
    %v364 = vadd.f32 %v357, %v358
    %v365 = vadd.f32 %v359, %v360
    %366 = vst [vmem:[%s2] sm:$0xff] %v361
    %367 = vst [vmem:[%s2 + $0x8] sm:$0xff] %v362
    %368 = vst [vmem:[%s2 + $0x10] sm:$0xff] %v363
    %369 = vst [vmem:[%s2 + $0x18] sm:$0xff] %v364
    %370 = vst [vmem:[%s2 + $0x20] sm:$0x1] %v365
    %v371 = vld [vmem:[#allocation3] sm:$0xff]
    %v372 = vld [vmem:[#allocation3 + $0x8] sm:$0xff]
    %v373 = vld [vmem:[#allocation3 + $0x10] sm:$0xff]
    %v374 = vld [vmem:[#allocation3 + $0x18] sm:$0xff]
    %v375 = vld [vmem:[#allocation3 + $0x20] sm:$0xff]
    %v376 = vld [vmem:[#allocation3 + $0x28] sm:$0xff]
    %v377 = vld [vmem:[#allocation3 + $0x30] sm:$0xff]
    %v378 = vld [vmem:[#allocation3 + $0x38] sm:$0xff]
    %v379 = vld [vmem:[#allocation3 + $0x40] sm:$0x1]
    %v380 = vld [vmem:[#allocation3 + $0x48] sm:$0x1]
    %v381 = vadd.f32 %v371, %v372
    %v382 = vadd.f32 %v373, %v374
    %v383 = vadd.f32 %v375, %v376
    %v384 = vadd.f32 %v377, %v378
    %v385 = vadd.f32 %v379, %v380
    %s386 = scalar_lea.vmem %s2, 40
    %387 = vst [vmem:[%s386] sm:$0xff] %v381
    %388 = vst [vmem:[%s386 + $0x8] sm:$0xff] %v382
    %389 = vst [vmem:[%s386 + $0x10] sm:$0xff] %v383
    %390 = vst [vmem:[%s386 + $0x18] sm:$0xff] %v384
    %391 = vst [vmem:[%s386 + $0x20] sm:$0x1] %v385
    %v392 = vld [vmem:[#allocation4] sm:$0xff]
    %v393 = vld [vmem:[#allocation4 + $0x8] sm:$0xff]
    %v394 = vld [vmem:[#allocation4 + $0x10] sm:$0xff]
    %v395 = vld [vmem:[#allocation4 + $0x18] sm:$0xff]
    %v396 = vld [vmem:[#allocation4 + $0x20] sm:$0xff]
    %v397 = vld [vmem:[#allocation4 + $0x28] sm:$0xff]
    %v398 = vld [vmem:[#allocation4 + $0x30] sm:$0xff]
    %v399 = vld [vmem:[#allocation4 + $0x38] sm:$0xff]
    %v400 = vld [vmem:[#allocation4 + $0x40] sm:$0x1]
    %v401 = vld [vmem:[#allocation4 + $0x48] sm:$0x1]
    %v402 = vadd.f32 %v392, %v393
    %v403 = vadd.f32 %v394, %v395
    %v404 = vadd.f32 %v396, %v397
    %v405 = vadd.f32 %v398, %v399
    %v406 = vadd.f32 %v400, %v401
    %s407 = scalar_lea.vmem %s2, 80
    %408 = vst [vmem:[%s407] sm:$0xff] %v402
    %409 = vst [vmem:[%s407 + $0x8] sm:$0xff] %v403
    %410 = vst [vmem:[%s407 + $0x10] sm:$0xff] %v404
    %411 = vst [vmem:[%s407 + $0x18] sm:$0xff] %v405
    %412 = vst [vmem:[%s407 + $0x20] sm:$0x1] %v406
  $region17: #{tpu_custom_call.1} parent=0 // pred_fallthru
    _
  // Predicated region
  $region18: #{tpu_custom_call.1} parent=0 // pred_check
    _
  $region19: #{tpu_custom_call.1} parent=0 // pred_check_branch
    %414 = sbr.rel (0) target = $region21
  $region20: #{tpu_custom_call.1} parent=0 // pred_region
    _
  $region21: #{tpu_custom_call.1} parent=0 // pred_fallthru
    _
  // Predicated region
  $region22: #{tpu_custom_call.1} parent=0 // pred_check
    _
  $region23: #{tpu_custom_call.1} parent=0 // pred_check_branch
    %416 = sbr.rel (0) target = $region25
  $region24: #{tpu_custom_call.1} parent=0 // pred_region
    _
  $region25: #{tpu_custom_call.1} parent=0 // pred_fallthru
    _

</llo_original>
